<compile_context>
chip_gen: v7x
topology: tpu7x:2x2x1
jax: 0.10.0
libtpu: 0.0.40
codegen_flags: <defaults>
</compile_context>

<pallas_src>
import jax
import jax.numpy as jnp
from jax.experimental import pallas as pl
from jax.experimental.pallas import tpu as pltpu

EPS = 1e-5  # nn.BatchNorm1d default eps


def stroke_kernel(x_ref, w1t_ref, b1_ref, w2t_ref, b2_ref, w3_ref, b3_ref, o_ref):
    # Layer 1: Linear(D, 64) (+ folded BN1), batch-on-lanes.
    # Contract the feature axis of both operands (A @ B^T form) so no explicit
    # transpose of the x tile is materialized: (64, D) x (tb, D) -> (64, tb).
    h1 = jax.lax.dot_general(
        w1t_ref[...], x_ref[...],
        dimension_numbers=(((1,), (1,)), ((), ())),
        preferred_element_type=jnp.float32)
    h1 = jnp.maximum(h1 + b1_ref[...], 0.0)          # bias column (64,1), ReLU
    # TODO(synk): Dropout(0.5) is the identity in inference mode; no RNG mask.

    # Layer 2: Linear(64, 32) (+ folded BN2): (32, 64) @ (64, tb) -> (32, tb).
    w2 = w2t_ref[...].astype(jnp.float32)
    h2 = jnp.dot(w2, h1, preferred_element_type=jnp.float32)
    h2 = jnp.maximum(h2 + b2_ref[...], 0.0)

    # Layer 3: Linear(32, 1).  A 1-wide matmul wastes the MXU -- VPU broadcast
    # multiply + XLU sublane reduction gives the lane-dense (1, tb) output row.
    out = jnp.sum(h2 * w3_ref[...], axis=0, keepdims=True) + b3_ref[...]
    o_ref[...] = out.astype(o_ref.dtype)


def _fold_bn(w, b, gamma, beta, mean, var):
    """Fold an inference-mode BatchNorm1d into the preceding Linear."""
    scale = gamma / jnp.sqrt(var + EPS)               # (1, F)
    return w * scale, (b - mean) * scale + beta       # (in, F), (1, F)


def _round_up(n, m):
    return ((n + m - 1) // m) * m


def _pick_tile(batch):
    """Batch tile: large enough to amortize the ~0.35us/step pipeline overhead,
    a multiple of 128 (lane/sublane aligned blocks), and >= 2 grid steps when
    the batch is big so v7x's two TensorCores both get work."""
    if batch <= 256:
        return batch                          # single full-array block
    n_steps = max(2, -(-batch // 8192))       # target <= 8192 rows per step
    return _round_up(-(-batch // n_steps), 128)


def stroke_model_forward(x, params, *, tb=None, compute_dtype=jnp.bfloat16):
    """x: (B, input_dim) f32. Returns (B,) f32 — matches `self.net(x).squeeze(1)`."""
    B, D = x.shape

    # Fold both eval-mode BatchNorms into the Linears (tiny, zero-cost arrays)
    # and lay everything out for batch-on-lanes compute.
    w1f, b1f = _fold_bn(params["w1"], params["b1"], params["g1"], params["be1"],
                        params["m1"], params["v1"])
    w2f, b2f = _fold_bn(params["w2"], params["b2"], params["g2"], params["be2"],
                        params["m2"], params["v2"])
    w1t = w1f.T.astype(compute_dtype)         # (64, D)   bf16 storage
    w2t = w2f.T.astype(compute_dtype)         # (32, 64)  bf16 storage
    b1c = b1f.T                               # (64, 1)   f32
    b2c = b2f.T                               # (32, 1)   f32
    w3c = params["w3"].astype(jnp.float32)    # (32, 1)   column for VPU reduce
    b3 = params["b3"]                         # (1, 1)    f32

    # Halve the dominant HBM stream.  (In a real pipeline x would ideally be
    # produced in bf16 already; this cast is a single cheap XLA op.)
    xc = x.astype(compute_dtype)

    if tb is None:
        tb = _pick_tile(B)
    n_blocks = pl.cdiv(B, tb)

    # Scoped-VMEM budget from the real per-step footprint (double-buffered,
    # lane-padded x tile + out tile + f32 intermediates + resident weights),
    # with 2x headroom; floor 16 MiB, cap 48 MiB (safe on v5e/v6e/v7x).
    cdt = jnp.dtype(compute_dtype).itemsize
    est = (2 * tb * _round_up(D, 128) * cdt          # x tiles (double-buffered)
           + 2 * 8 * _round_up(tb, 128) * 4          # out tiles
           + tb * (64 + 32 + 16) * 4                 # h1 / h2 / transposed-x scratch
           + 64 * 1024)                              # resident weights / biases
    vmem_limit = int(min(48 * 2**20, max(16 * 2**20, 2 * est)))

    in_specs = [
        pl.BlockSpec((tb, D), lambda i: (i, 0)),      # x: tiled over batch
        pl.BlockSpec((64, D), lambda i: (0, 0)),      # resident folded weights
        pl.BlockSpec((64, 1), lambda i: (0, 0)),
        pl.BlockSpec((32, 64), lambda i: (0, 0)),
        pl.BlockSpec((32, 1), lambda i: (0, 0)),
        pl.BlockSpec((32, 1), lambda i: (0, 0)),
        pl.BlockSpec((1, 1), lambda i: (0, 0)),
    ]
    out_specs = pl.BlockSpec((1, tb), lambda i: (0, i))   # lane-dense output row

    out = pl.pallas_call(
        stroke_kernel,
        out_shape=jax.ShapeDtypeStruct((1, B), jnp.float32),
        grid=(n_blocks,),
        in_specs=in_specs,
        out_specs=out_specs,
        compiler_params=pltpu.CompilerParams(
            dimension_semantics=("parallel",),
            vmem_limit_bytes=vmem_limit,
        ),
    )(xc, w1t, b1c, w2t, b2c, w3c, b3)

    return out[0, :B]


def init_params(key, input_dim):
    k1, k2, k3, kbn = jax.random.split(key, 4)

    def linear(k, fan_in, fan_out):
        bound = 1.0 / jnp.sqrt(fan_in)
        kw, kb = jax.random.split(k)
        w = jax.random.uniform(kw, (fan_in, fan_out), jnp.float32, -bound, bound)
        b = jax.random.uniform(kb, (1, fan_out), jnp.float32, -bound, bound)
        return w, b

    w1, b1 = linear(k1, input_dim, 64)
    w2, b2 = linear(k2, 64, 32)
    w3, b3 = linear(k3, 32, 1)

    # Non-trivial BatchNorm stats (as a trained model would have in eval mode)
    # so the BN-folding path is actually exercised by the correctness check.
    def bn(k, n):
        kg, kb_, km, kv = jax.random.split(k, 4)
        gamma = 1.0 + 0.1 * jax.random.normal(kg, (1, n), jnp.float32)
        beta = 0.1 * jax.random.normal(kb_, (1, n), jnp.float32)
        mean = 0.1 * jax.random.normal(km, (1, n), jnp.float32)
        var = jnp.abs(1.0 + 0.1 * jax.random.normal(kv, (1, n), jnp.float32))
        return gamma, beta, mean, var

    kbn1, kbn2 = jax.random.split(kbn)
    g1, be1, m1, v1 = bn(kbn1, 64)
    g2, be2, m2, v2 = bn(kbn2, 32)

    return dict(
        w1=w1, b1=b1, g1=g1, be1=be1, m1=m1, v1=v1,
        w2=w2, b2=b2, g2=g2, be2=be2, m2=m2, v2=v2,
        w3=w3, b3=b3,
    )


if __name__ == "__main__":
    key = jax.random.PRNGKey(0)
    kx, kp = jax.random.split(key)

    B, INPUT_DIM = 8, 16
    x = jax.random.normal(kx, (B, INPUT_DIM), jnp.float32)
    params = init_params(kp, INPUT_DIM)

    y = stroke_model_forward(x, params)
    jax.block_until_ready(y)

    # Pure-JAX references of the *unfused* forward pass (BN in eval mode).
    def ref_f32(x, p):
        h = x @ p["w1"] + p["b1"]
        h = (h - p["m1"]) / jnp.sqrt(p["v1"] + EPS) * p["g1"] + p["be1"]
        h = jnp.maximum(h, 0.0)
        h = h @ p["w2"] + p["b2"]
        h = (h - p["m2"]) / jnp.sqrt(p["v2"] + EPS) * p["g2"] + p["be2"]
        h = jnp.maximum(h, 0.0)
        return (h @ p["w3"] + p["b3"])[:, 0]

    def ref_bf16_storage(x, p):
        # Same math with BN folded and x / matmul weights rounded to bf16 (the
        # kernel's storage format); all accumulation stays in f32.
        q = lambda a: a.astype(jnp.bfloat16).astype(jnp.float32)
        w1f, b1f = _fold_bn(p["w1"], p["b1"], p["g1"], p["be1"], p["m1"], p["v1"])
        w2f, b2f = _fold_bn(p["w2"], p["b2"], p["g2"], p["be2"], p["m2"], p["v2"])
        h = jnp.maximum(q(x) @ q(w1f) + b1f, 0.0)
        h = jnp.maximum(h @ q(w2f) + b2f, 0.0)
        return (h @ p["w3"] + p["b3"])[:, 0]

    assert y.shape == (B,)
    y_q = ref_bf16_storage(x, params)
    assert jnp.allclose(y, y_q, atol=1e-3, rtol=1e-3), (y, y_q)
    y_f = ref_f32(x, params)
    assert jnp.allclose(y, y_f, atol=5e-2, rtol=5e-2), (y, y_f)
    print("KERNEL_OK")
</pallas_src>

<mosaic_0001>
module attributes {stable_mosaic.version = 11 : i64} {
  func.func @stroke_kernel(%arg0: i32, %arg1: memref<8x16xbf16, #tpu.memory_space<vmem>>, %arg2: memref<64x16xbf16, #tpu.memory_space<vmem>>, %arg3: memref<64x1xf32, #tpu.memory_space<vmem>>, %arg4: memref<32x64xbf16, #tpu.memory_space<vmem>>, %arg5: memref<32x1xf32, #tpu.memory_space<vmem>>, %arg6: memref<32x1xf32, #tpu.memory_space<vmem>>, %arg7: memref<1x1xf32, #tpu.memory_space<vmem>>, %arg8: memref<1x8xf32, #tpu.memory_space<vmem>>) attributes {dimension_semantics = [#tpu.dimension_semantics<parallel>], iteration_bounds = array<i64: 1>, scalar_prefetch = 0 : i64, scratch_operands = 0 : i64, tpu.core_type = #tpu.core_type<tc>, window_params = [{transform_indices = @transform_0, window_bounds = array<i64: 8, 16>}, {pipeline_mode = #tpu.pipeline_mode<synchronous>, transform_indices = @transform_1, window_bounds = array<i64: 64, 16>}, {pipeline_mode = #tpu.pipeline_mode<synchronous>, transform_indices = @transform_2, window_bounds = array<i64: 64, 1>}, {pipeline_mode = #tpu.pipeline_mode<synchronous>, transform_indices = @transform_3, window_bounds = array<i64: 32, 64>}, {pipeline_mode = #tpu.pipeline_mode<synchronous>, transform_indices = @transform_4, window_bounds = array<i64: 32, 1>}, {pipeline_mode = #tpu.pipeline_mode<synchronous>, transform_indices = @transform_5, window_bounds = array<i64: 32, 1>}, {pipeline_mode = #tpu.pipeline_mode<synchronous>, transform_indices = @transform_6, window_bounds = array<i64: 1, 1>}, {transform_indices = @transform_7, window_bounds = array<i64: 1, 8>}]} {
    %c0 = arith.constant 0 : index
    %c0_0 = arith.constant 0 : index
    %0 = vector.load %arg2[%c0, %c0_0] : memref<64x16xbf16, #tpu.memory_space<vmem>>, vector<64x16xbf16>
    %c0_1 = arith.constant 0 : index
    %c0_2 = arith.constant 0 : index
    %1 = vector.load %arg1[%c0_1, %c0_2] : memref<8x16xbf16, #tpu.memory_space<vmem>>, vector<8x16xbf16>
    %cst = arith.constant dense<0.000000e+00> : vector<64x8xf32>
    %2 = tpu.matmul %0, %1, %cst {dimension_numbers = #tpu.dot_dimension_numbers<[1], [1], [0], [0], [0, 0, 1, 0], [], []>} : vector<64x16xbf16>, vector<8x16xbf16>, vector<64x8xf32> -> vector<64x8xf32>
    %c0_3 = arith.constant 0 : index
    %c0_4 = arith.constant 0 : index
    %3 = vector.load %arg3[%c0_3, %c0_4] : memref<64x1xf32, #tpu.memory_space<vmem>>, vector<64x1xf32>
    %4 = vector.broadcast %3 : vector<64x1xf32> to vector<64x8xf32>
    %5 = arith.addf %2, %4 : vector<64x8xf32>
    %cst_5 = arith.constant 0.000000e+00 : f32
    %6 = vector.broadcast %cst_5 : f32 to vector<64x8xf32>
    %7 = arith.maximumf %5, %6 : vector<64x8xf32>
    %c0_6 = arith.constant 0 : index
    %c0_7 = arith.constant 0 : index
    %8 = vector.load %arg4[%c0_6, %c0_7] : memref<32x64xbf16, #tpu.memory_space<vmem>>, vector<32x64xbf16>
    %9 = arith.extf %8 : vector<32x64xbf16> to vector<32x64xf32>
    %cst_8 = arith.constant dense<0.000000e+00> : vector<32x8xf32>
    %10 = tpu.matmul %9, %7, %cst_8 {dimension_numbers = #tpu.dot_dimension_numbers<[1], [0], [0], [1], [0, 0, 1, 1], [], []>} : vector<32x64xf32>, vector<64x8xf32>, vector<32x8xf32> -> vector<32x8xf32>
    %c0_9 = arith.constant 0 : index
    %c0_10 = arith.constant 0 : index
    %11 = vector.load %arg5[%c0_9, %c0_10] : memref<32x1xf32, #tpu.memory_space<vmem>>, vector<32x1xf32>
    %12 = vector.broadcast %11 : vector<32x1xf32> to vector<32x8xf32>
    %13 = arith.addf %10, %12 : vector<32x8xf32>
    %cst_11 = arith.constant 0.000000e+00 : f32
    %14 = vector.broadcast %cst_11 : f32 to vector<32x8xf32>
    %15 = arith.maximumf %13, %14 : vector<32x8xf32>
    %c0_12 = arith.constant 0 : index
    %c0_13 = arith.constant 0 : index
    %16 = vector.load %arg6[%c0_12, %c0_13] : memref<32x1xf32, #tpu.memory_space<vmem>>, vector<32x1xf32>
    %17 = vector.broadcast %16 : vector<32x1xf32> to vector<32x8xf32>
    %18 = arith.mulf %15, %17 : vector<32x8xf32>
    %cst_14 = arith.constant dense<0.000000e+00> : vector<8xf32>
    %19 = vector.multi_reduction <add>, %18, %cst_14 [0] : vector<32x8xf32> to vector<8xf32>
    %20 = vector.shape_cast %19 : vector<8xf32> to vector<1x8xf32>
    %c0_15 = arith.constant 0 : index
    %c0_16 = arith.constant 0 : index
    %21 = vector.load %arg7[%c0_15, %c0_16] : memref<1x1xf32, #tpu.memory_space<vmem>>, vector<1x1xf32>
    %22 = vector.broadcast %21 : vector<1x1xf32> to vector<1x8xf32>
    %23 = arith.addf %20, %22 : vector<1x8xf32>
    %c0_17 = arith.constant 0 : index
    %c0_18 = arith.constant 0 : index
    %24 = vector.load %arg8[%c0_17, %c0_18] : memref<1x8xf32, #tpu.memory_space<vmem>>, vector<1x8xf32>
    tpu.vector_store %arg8[%c0_17, %c0_18], %23 {strides = array<i32>} : memref<1x8xf32, #tpu.memory_space<vmem>>, vector<1x8xf32>,
    return
  }
  func.func @transform_0(%arg0: i32) -> (i32, i32) {
    %c0_i32 = arith.constant 0 : i32
    %c0_i32_0 = arith.constant 0 : i32
    return %arg0, %c0_i32 : i32, i32
  }
  func.func @transform_1(%arg0: i32) -> (i32, i32) {
    %c0_i32 = arith.constant 0 : i32
    %c0_i32_0 = arith.constant 0 : i32
    %c0_i32_1 = arith.constant 0 : i32
    return %c0_i32, %c0_i32_0 : i32, i32
  }
  func.func @transform_2(%arg0: i32) -> (i32, i32) {
    %c0_i32 = arith.constant 0 : i32
    %c0_i32_0 = arith.constant 0 : i32
    %c0_i32_1 = arith.constant 0 : i32
    return %c0_i32, %c0_i32_0 : i32, i32
  }
  func.func @transform_3(%arg0: i32) -> (i32, i32) {
    %c0_i32 = arith.constant 0 : i32
    %c0_i32_0 = arith.constant 0 : i32
    %c0_i32_1 = arith.constant 0 : i32
    return %c0_i32, %c0_i32_0 : i32, i32
  }
  func.func @transform_4(%arg0: i32) -> (i32, i32) {
    %c0_i32 = arith.constant 0 : i32
    %c0_i32_0 = arith.constant 0 : i32
    %c0_i32_1 = arith.constant 0 : i32
    return %c0_i32, %c0_i32_0 : i32, i32
  }
  func.func @transform_5(%arg0: i32) -> (i32, i32) {
    %c0_i32 = arith.constant 0 : i32
    %c0_i32_0 = arith.constant 0 : i32
    %c0_i32_1 = arith.constant 0 : i32
    return %c0_i32, %c0_i32_0 : i32, i32
  }
  func.func @transform_6(%arg0: i32) -> (i32, i32) {
    %c0_i32 = arith.constant 0 : i32
    %c0_i32_0 = arith.constant 0 : i32
    %c0_i32_1 = arith.constant 0 : i32
    return %c0_i32, %c0_i32_0 : i32, i32
  }
  func.func @transform_7(%arg0: i32) -> (i32, i32) {
    %c0_i32 = arith.constant 0 : i32
    %c0_i32_0 = arith.constant 0 : i32
    return %c0_i32, %arg0 : i32, i32
  }
}

</mosaic_0001>

<llo_original>
// kernel: tpu_custom_call.1
$region0: #{tpu_custom_call.1}
  #allocation0 [shape = 'u32[]', space=smem, size = 0x4, offset = 0x4, fixed_abs, tag = 'smem constant byte address 0x4 - core index']
  #allocation1 [shape = 'u32[144,128]{1,0:T(1,128)}', space=vmem, size = 0x12000, scoped, tag = 'internal scratch']
  #allocation2 [shape = 'f32[1,1]{1,0:T(1,128)S(1)}', space=vmem, size = 0x200, scoped, tag = 'scoped memory for tpu_custom_call.1']
  %s0 = inlined_call_operand.vmem [shape: bf16[8,16], index: 0, kind: input, shape index: {}]
  %s1 = inlined_call_operand.vmem [shape: bf16[64,16], index: 1, kind: input, shape index: {}]
  %s2 = inlined_call_operand.vmem [shape: f32[64,1], index: 2, kind: input, shape index: {}]
  %s3 = inlined_call_operand.vmem [shape: bf16[32,64], index: 3, kind: input, shape index: {}]
  %s4 = inlined_call_operand.vmem [shape: f32[32,1], index: 4, kind: input, shape index: {}]
  %s5 = inlined_call_operand.vmem [shape: f32[32,1], index: 5, kind: input, shape index: {}]
  %s6 = inlined_call_operand.<no memory space> [shape: f32[1,1], index: 6, kind: input, shape index: {}]
  %s7 = inlined_call_operand.hbm [shape: f32[1,8], index: 7, kind: output, shape index: {}]
  %s8 = sld [smem:[#allocation0]]
  $region38: #{tpu_custom_call.1} parent=0
    _
  %s10 = ssub.s32 1, %s8
  %s11 = scalar_select 0, %s10, %s8
  %v12 = vstv %s6
  %13 = vst [vmem:[#allocation2] sm:$0x1] %v12
  $region1: #{tpu_custom_call.1} parent=0
    #allocation3 [shape = 'u8[512]{0}', space=vmem, size = 0x400, scoped, tag = 'output window, operand 0, single buffered']
    #allocation4 [shape = 's32[1]{0}', space=sflag, size = 0x4, scoped, tag = 'scoped memory for tpu_custom_call.1']
    %14 = vsyncpa [#allocation4], 0
    // Predicated region
    $region2: #{tpu_custom_call.1} parent=1 // pred_check
      _
    $region3: #{tpu_custom_call.1} parent=1 // pred_check_branch
      %16 = sbr.rel (0) target = $region5
    $region4: #{tpu_custom_call.1} parent=1 // pred_region
      _
    $region5: #{tpu_custom_call.1} parent=1 // pred_fallthru
      _
    // Predicated region
    $region6: #{tpu_custom_call.1} parent=1 // pred_check
      _
    $region7: #{tpu_custom_call.1} parent=1 // pred_check_branch
      %18 = sbr.rel (0) target = $region9
    $region8: #{tpu_custom_call.1} parent=1 // pred_region
      _
    $region9: #{tpu_custom_call.1} parent=1 // pred_fallthru
      _
    // Predicated region
    $region10: #{tpu_custom_call.1} parent=1 // pred_check
      _
    $region11: #{tpu_custom_call.1} parent=1 // pred_check_branch
      %20 = sbr.rel (0) target = $region13
    $region12: #{tpu_custom_call.1} parent=1 // pred_region
      _
    $region13: #{tpu_custom_call.1} parent=1 // pred_fallthru
      _
    // Predicated region
    $region14: #{tpu_custom_call.1} parent=1 // pred_check
      _
    $region15: #{tpu_custom_call.1} parent=1 // pred_check_branch
      %22 = sbr.rel (0) target = $region17
    $region16: #{tpu_custom_call.1} parent=1 // pred_region
      _
    $region17: #{tpu_custom_call.1} parent=1 // pred_fallthru
      _
    // Predicated region
    $region18: #{tpu_custom_call.1} parent=1 // pred_check
      _
    $region19: #{tpu_custom_call.1} parent=1 // pred_check_branch
      %24 = sbr.rel (0) target = $region21
    $region20: #{tpu_custom_call.1} parent=1 // pred_region
      _
    $region21: #{tpu_custom_call.1} parent=1 // pred_fallthru
      _
    // Predicated region
    $region22: #{tpu_custom_call.1} parent=1 // pred_check
      _
    $region23: #{tpu_custom_call.1} parent=1 // pred_check_branch
      %26 = sbr.rel (0) target = $region25
    $region24: #{tpu_custom_call.1} parent=1 // pred_region
      _
    $region25: #{tpu_custom_call.1} parent=1 // pred_fallthru
      _
    // Predicated region
    $region26: #{tpu_custom_call.1} parent=1 // pred_check
      _
    $region27: #{tpu_custom_call.1} parent=1 // pred_check_branch
      %28 = sbr.rel (0) target = $region29
    $region28: #{tpu_custom_call.1} parent=1 // pred_region
      _
    $region29: #{tpu_custom_call.1} parent=1 // pred_fallthru
      _
    %v30 = vld [vmem:[%s1] sm:$0xf]
    %v31 = vld [vmem:[%s1 + $0x4] sm:$0xf]
    %v32 = vld [vmem:[%s1 + $0x8] sm:$0xf]
    %v33 = vld [vmem:[%s1 + $0xc] sm:$0xf]
    %v34 = vld [vmem:[%s1 + $0x10] sm:$0xf]
    %v35 = vld [vmem:[%s1 + $0x14] sm:$0xf]
    %v36 = vld [vmem:[%s1 + $0x18] sm:$0xf]
    %v37 = vld [vmem:[%s1 + $0x1c] sm:$0xf]
    %v38 = vld [vmem:[%s0] sm:$0xf]
    %v39 = vld [vmem:[%s2] sm:$0xff]
    %v40 = vld [vmem:[%s2 + $0x8] sm:$0xff]
    %v41 = vld [vmem:[%s2 + $0x10] sm:$0xff]
    %v42 = vld [vmem:[%s2 + $0x18] sm:$0xff]
    %v43 = vld [vmem:[%s2 + $0x20] sm:$0xff]
    %v44 = vld [vmem:[%s2 + $0x28] sm:$0xff]
    %v45 = vld [vmem:[%s2 + $0x30] sm:$0xff]
    %v46 = vld [vmem:[%s2 + $0x38] sm:$0xff]
    %48 = vset.pattern.permute.xlu0 0
    %49 = vperm.xlu0 %48, %v39
    %v50 = vpop.permute.xlu0 %49
    %53 = vset.pattern.permute.xlu0 0
    %54 = vperm.xlu0 %53, %v40
    %v55 = vpop.permute.xlu0 %54
    %58 = vset.pattern.permute.xlu0 0
    %59 = vperm.xlu0 %58, %v41
    %v60 = vpop.permute.xlu0 %59
    %63 = vset.pattern.permute.xlu0 0
    %64 = vperm.xlu0 %63, %v42
    %v65 = vpop.permute.xlu0 %64
    %68 = vset.pattern.permute.xlu0 0
    %69 = vperm.xlu0 %68, %v43
    %v70 = vpop.permute.xlu0 %69
    %73 = vset.pattern.permute.xlu0 0
    %74 = vperm.xlu0 %73, %v44
    %v75 = vpop.permute.xlu0 %74
    %78 = vset.pattern.permute.xlu0 0
    %79 = vperm.xlu0 %78, %v45
    %v80 = vpop.permute.xlu0 %79
    %83 = vset.pattern.permute.xlu0 0
    %84 = vperm.xlu0 %83, %v46
    %v85 = vpop.permute.xlu0 %84
    %v95 = vunpack.c.l.b16 %v30
    %v96 = vunpack.c.l.b16 %v31
    %v97 = vunpack.c.l.b16 %v32
    %v98 = vunpack.c.l.b16 %v33
    %v99 = vunpack.c.l.b16 %v34
    %v100 = vunpack.c.l.b16 %v35
    %v101 = vunpack.c.l.b16 %v36
    %v102 = vunpack.c.l.b16 %v37
    %v103 = vpack.c.b16 %v96, %v95
    %v104 = vpack.c.b16 %v98, %v97
    %v105 = vpack.c.b16 %v100, %v99
    %v106 = vpack.c.b16 %v102, %v101
    %vm107 = vcmask 130048
    %v109 = vsel %vm107, %v103, 0
    %v112 = vsel %vm107, %v104, 0
    %v115 = vsel %vm107, %v105, 0
    %v118 = vsel %vm107, %v106, 0
    %v121 = vsel %vm107, %v38, 0
    %123 = vmatprep.subr.bf16.mxu0 0
    %124 = vmatpush1.bf16.xpose.msra.mxu0 %v121
    %125 = vmatprep.subr.bf16.mxu0 0
    %126 = vmatpush1.bf16.xpose.msra.mxu0 0
    %127 = vmatprep.subr.bf16.mxu0 0
    %128 = vmatpush1.bf16.xpose.msra.mxu0 0
    %129 = vmatprep.subr.bf16.mxu0 0
    %130 = vmatpush1.bf16.xpose.msra.mxu0 0
    %131 = vmatprep.subr.bf16.mxu0 0
    %132 = vmatpush1.bf16.xpose.msra.mxu0 0
    %133 = vmatprep.subr.bf16.mxu0 0
    %134 = vmatpush1.bf16.xpose.msra.mxu0 0
    %135 = vmatprep.subr.bf16.mxu0 0
    %136 = vmatpush1.bf16.xpose.msra.mxu0 0
    %137 = vmatprep.subr.bf16.mxu0 0
    %138 = vmatpush1.bf16.xpose.msra.mxu0 0
    %139 = vmatprep.subr.bf16.mxu0 0
    %140 = vmatpush1.bf16.xpose.msra.mxu0 0
    %141 = vmatprep.subr.bf16.mxu0 0
    %142 = vmatpush1.bf16.xpose.msra.mxu0 0
    %143 = vmatprep.subr.bf16.mxu0 0
    %144 = vmatpush1.bf16.xpose.msra.mxu0 0
    %145 = vmatprep.subr.bf16.mxu0 0
    %146 = vmatpush1.bf16.xpose.msra.mxu0 0
    %147 = vmatprep.subr.bf16.mxu0 0
    %148 = vmatpush1.bf16.xpose.msra.mxu0 0
    %149 = vmatprep.subr.bf16.mxu0 0
    %150 = vmatpush1.bf16.xpose.msra.mxu0 0
    %151 = vmatprep.subr.bf16.mxu0 0
    %152 = vmatpush1.bf16.xpose.msra.mxu0 0
    %153 = vmatprep.subr.bf16.mxu0 0
    %154 = vmatpush1.bf16.xpose.msra.mxu0 0
    %155 = vmatprep.mubr.bf16.mxu0 0
    %156 = vmatmul.mubr.bf16.gmra.mrb[0].mxu0 %v109
    %v157 = vpop.f32.mrb[0].mxu0
    %v158 = vadd.f32 %v50, %v157
    %v159 = vpop.f32.mrb[0].mxu0
    %v160 = vpop.f32.mrb[0].mxu0
    %v161 = vadd.f32 %v55, %v160
    %v162 = vpop.f32.mrb[0].mxu0
    %163 = vmatprep.mubr.bf16.mxu0 0
    %164 = vmatmul.mubr.bf16.gmra.mrb[0].mxu0 %v112
    %v165 = vpop.f32.mrb[0].mxu0
    %v166 = vadd.f32 %v60, %v165
    %v167 = vpop.f32.mrb[0].mxu0
    %v168 = vpop.f32.mrb[0].mxu0
    %v169 = vadd.f32 %v65, %v168
    %v170 = vpop.f32.mrb[0].mxu0
    %171 = vmatprep.mubr.bf16.mxu0 0
    %172 = vmatmul.mubr.bf16.gmra.mrb[0].mxu0 %v115
    %v173 = vpop.f32.mrb[0].mxu0
    %v174 = vadd.f32 %v70, %v173
    %v175 = vpop.f32.mrb[0].mxu0
    %v176 = vpop.f32.mrb[0].mxu0
    %v177 = vadd.f32 %v75, %v176
    %v178 = vpop.f32.mrb[0].mxu0
    %179 = vmatprep.mubr.bf16.mxu0 0
    %180 = vmatmul.mubr.bf16.gmra.mrb[0].mxu0 %v118
    %v181 = vpop.f32.mrb[0].mxu0
    %v182 = vadd.f32 %v80, %v181
    %v183 = vpop.f32.mrb[0].mxu0
    %v184 = vpop.f32.mrb[0].mxu0
    %v185 = vadd.f32 %v85, %v184
    %v186 = vpop.f32.mrb[0].mxu0
    %187 = vdwg.mxu0
    %v188 = vmax.f32 %v158, 0.0
    %v189 = vmax.f32 %v161, 0.0
    %v190 = vmax.f32 %v166, 0.0
    %v191 = vmax.f32 %v169, 0.0
    %v192 = vmax.f32 %v174, 0.0
    %v193 = vmax.f32 %v177, 0.0
    %v194 = vmax.f32 %v182, 0.0
    %v195 = vmax.f32 %v185, 0.0
    %v196 = vld [vmem:[%s3] sm:$0xf]
    %v197 = vld [vmem:[%s3 + $0x4] sm:$0xf]
    %v198 = vld [vmem:[%s3 + $0x8] sm:$0xf]
    %v199 = vld [vmem:[%s3 + $0xc] sm:$0xf]
    %v200 = vunpack.c.l.bf16 %v196
    %v201 = vunpack.c.l.bf16 %v197
    %v202 = vunpack.c.l.bf16 %v198
    %v203 = vunpack.c.l.bf16 %v199
    %v204 = vld [vmem:[%s4] sm:$0xff]
    %v205 = vld [vmem:[%s4 + $0x8] sm:$0xff]
    %v206 = vld [vmem:[%s4 + $0x10] sm:$0xff]
    %v207 = vld [vmem:[%s4 + $0x18] sm:$0xff]
    %209 = vset.pattern.permute.xlu0 0
    %210 = vperm.xlu0 %209, %v204
    %v211 = vpop.permute.xlu0 %210
    %214 = vset.pattern.permute.xlu0 0
    %215 = vperm.xlu0 %214, %v205
    %v216 = vpop.permute.xlu0 %215
    %219 = vset.pattern.permute.xlu0 0
    %220 = vperm.xlu0 %219, %v206
    %v221 = vpop.permute.xlu0 %220
    %224 = vset.pattern.permute.xlu0 0
    %225 = vperm.xlu0 %224, %v207
    %v226 = vpop.permute.xlu0 %225
    %vm228 = vcmask 523264
    %v230 = vsel %vm228, %v200, 0
    %v233 = vsel %vm228, %v201, 0
    %v236 = vsel %vm228, %v202, 0
    %v239 = vsel %vm228, %v203, 0
    %241 = vmatprep.subr.mxu0 0.0
    %242 = vmatpush1.msra.mxu0 %v188
    %243 = vmatprep.subr.mxu0 0.0
    %244 = vmatpush1.msra.mxu0 %v189
    %245 = vmatprep.subr.mxu0 0.0
    %246 = vmatpush1.msra.mxu0 %v190
    %247 = vmatprep.subr.mxu0 0.0
    %248 = vmatpush1.msra.mxu0 %v191
    %249 = vmatprep.subr.mxu0 0.0
    %250 = vmatpush1.msra.mxu0 %v192
    %251 = vmatprep.subr.mxu0 0.0
    %252 = vmatpush1.msra.mxu0 %v193
    %253 = vmatprep.subr.mxu0 0.0
    %254 = vmatpush1.msra.mxu0 %v194
    %255 = vmatprep.subr.mxu0 0.0
    %256 = vmatpush1.msra.mxu0 %v195
    %257 = vmatprep.subr.mxu0 0.0
    %258 = vmatpush1.msra.mxu0 0.0
    %259 = vmatprep.subr.mxu0 0.0
    %260 = vmatpush1.msra.mxu0 0.0
    %261 = vmatprep.subr.mxu0 0.0
    %262 = vmatpush1.msra.mxu0 0.0
    %263 = vmatprep.subr.mxu0 0.0
    %264 = vmatpush1.msra.mxu0 0.0
    %265 = vmatprep.subr.mxu0 0.0
    %266 = vmatpush1.msra.mxu0 0.0
    %267 = vmatprep.subr.mxu0 0.0
    %268 = vmatpush1.msra.mxu0 0.0
    %269 = vmatprep.subr.mxu0 0.0
    %270 = vmatpush1.msra.mxu0 0.0
    %271 = vmatprep.subr.mxu0 0.0
    %272 = vmatpush1.msra.mxu0 0.0
    %273 = vmatprep.subr.mxu0 0.0
    %274 = vmatpush1.msra.mxu0 0.0
    %275 = vmatprep.subr.mxu0 0.0
    %276 = vmatpush1.msra.mxu0 0.0
    %277 = vmatprep.subr.mxu0 0.0
    %278 = vmatpush1.msra.mxu0 0.0
    %279 = vmatprep.subr.mxu0 0.0
    %280 = vmatpush1.msra.mxu0 0.0
    %281 = vmatprep.subr.mxu0 0.0
    %282 = vmatpush1.msra.mxu0 0.0
    %283 = vmatprep.subr.mxu0 0.0
    %284 = vmatpush1.msra.mxu0 0.0
    %285 = vmatprep.subr.mxu0 0.0
    %286 = vmatpush1.msra.mxu0 0.0
    %287 = vmatprep.subr.mxu0 0.0
    %288 = vmatpush1.msra.mxu0 0.0
    %289 = vmatprep.subr.mxu0 0.0
    %290 = vmatpush1.msra.mxu0 0.0
    %291 = vmatprep.subr.mxu0 0.0
    %292 = vmatpush1.msra.mxu0 0.0
    %293 = vmatprep.subr.mxu0 0.0
    %294 = vmatpush1.msra.mxu0 0.0
    %295 = vmatprep.subr.mxu0 0.0
    %296 = vmatpush1.msra.mxu0 0.0
    %297 = vmatprep.subr.mxu0 0.0
    %298 = vmatpush1.msra.mxu0 0.0
    %299 = vmatprep.subr.mxu0 0.0
    %300 = vmatpush1.msra.mxu0 0.0
    %301 = vmatprep.subr.mxu0 0.0
    %302 = vmatpush1.msra.mxu0 0.0
    %303 = vmatprep.subr.mxu0 0.0
    %304 = vmatpush1.msra.mxu0 0.0
    %305 = vmatprep.mubr.f32.mxu0 0.0
    %306 = vmatmul.mubr.f32.gmra.mrb[0].mxu0 %v230
    %v307 = vpop.f32.mrb[0].mxu0
    %v308 = vadd.f32 %v211, %v307
    %v309 = vpop.f32.mrb[0].mxu0
    %310 = vmatprep.mubr.f32.mxu0 0.0
    %311 = vmatmul.mubr.f32.gmra.mrb[0].mxu0 %v233
    %v312 = vpop.f32.mrb[0].mxu0
    %v313 = vadd.f32 %v216, %v312
    %v314 = vpop.f32.mrb[0].mxu0
    %315 = vmatprep.mubr.f32.mxu0 0.0
    %316 = vmatmul.mubr.f32.gmra.mrb[0].mxu0 %v236
    %v317 = vpop.f32.mrb[0].mxu0
    %v318 = vadd.f32 %v221, %v317
    %v319 = vpop.f32.mrb[0].mxu0
    %320 = vmatprep.mubr.f32.mxu0 0.0
    %321 = vmatmul.mubr.f32.gmra.mrb[0].mxu0 %v239
    %v322 = vpop.f32.mrb[0].mxu0
    %v323 = vadd.f32 %v226, %v322
    %v324 = vpop.f32.mrb[0].mxu0
    %325 = vdwg.mxu0
    %v326 = vmax.f32 %v308, 0.0
    %v327 = vmax.f32 %v313, 0.0
    %v328 = vmax.f32 %v318, 0.0
    %v329 = vmax.f32 %v323, 0.0
    %v330 = vld [vmem:[%s5] sm:$0xff]
    %v331 = vld [vmem:[%s5 + $0x8] sm:$0xff]
    %v332 = vld [vmem:[%s5 + $0x10] sm:$0xff]
    %v333 = vld [vmem:[%s5 + $0x18] sm:$0xff]
    %335 = vset.pattern.permute.xlu0 0
    %336 = vperm.xlu0 %335, %v330
    %v337 = vpop.permute.xlu0 %336
    %340 = vset.pattern.permute.xlu0 0
    %341 = vperm.xlu0 %340, %v331
    %v342 = vpop.permute.xlu0 %341
    %345 = vset.pattern.permute.xlu0 0
    %346 = vperm.xlu0 %345, %v332
    %v347 = vpop.permute.xlu0 %346
    %350 = vset.pattern.permute.xlu0 0
    %351 = vperm.xlu0 %350, %v333
    %v352 = vpop.permute.xlu0 %351
    %v354 = vmul.f32 %v326, %v337
    %v355 = vmul.f32 %v327, %v342
    %v356 = vmul.f32 %v328, %v347
    %v357 = vmul.f32 %v329, %v352
    %vm358 = vcmask 64512
    %v359 = vsel %vm358, %v354, 0.0
    %v360 = vsel %vm358, %v355, 0.0
    %v361 = vadd.f32 %v359, %v360
    %v362 = vsel %vm358, %v356, 0.0
    %v363 = vadd.f32 %v361, %v362
    %v364 = vsel %vm358, %v357, 0.0
    %v365 = vadd.f32 %v363, %v364
    %v366 = vrot.slane %v365, 4
    %v367 = vadd.f32 %v365, %v366
    %v368 = vrot.slane %v367, 2
    %v369 = vadd.f32 %v367, %v368
    %v370 = vrot.slane %v369, 1
    %v371 = vadd.f32 %v369, %v370
    %v372 = vld [vmem:[#allocation2] sm:$0x1]
    %374 = vset.pattern.permute.xlu0 0
    %375 = vperm.xlu0 %374, %v372
    %v376 = vpop.permute.xlu0 %375
    %v378 = vlaneseq
    %v379 = vshrl.u32 %v378, 7
    %v380 = vsub.s32 0, %v379
    %v381 = vrot.slane %v376, %v380
    %v382 = vadd.f32 %v371, %v381
    %vm383 = vcmask 57344
    %384 = vst.msk [vmem:[#allocation3] sm:$0x1] %vm383, %v382
    // Predicated region
    $region30: #{tpu_custom_call.1} parent=1 // pred_check
      _
    $region31: #{tpu_custom_call.1} parent=1 // pred_check_branch
      %386 = sbr.rel (0) target = $region33
    $region32: #{tpu_custom_call.1} parent=1 // pred_region
      %s388 = ssub.s32 16, 16
      %389 = vsyncadd [#allocation4], %s388
      %s391 = sshll.u32 [#allocation3], 4
      %s392 = int_to_ptr.vmem [resolvable:$true] %s391
      %394 = dma.vmem_to_hbm [thread:$0]  %s392, 16, %s7, [#allocation4]
    $region33: #{tpu_custom_call.1} parent=1 // pred_fallthru
      _
    // Predicated region
    $region34: #{tpu_custom_call.1} parent=1 // pred_check
      _
    $region35: #{tpu_custom_call.1} parent=1 // pred_check_branch
      %396 = sbr.rel (0) target = $region37
    $region36: #{tpu_custom_call.1} parent=1 // pred_region
      %397 = dma.done [#allocation4], 16
    $region37: #{tpu_custom_call.1} parent=1 // pred_fallthru
      _
    %398 = vsyncpa [#allocation4], 1

</llo_original>
